<compile_context>
chip_gen: v7x
topology: tpu7x:2x2x1
jax: 0.10.0
libtpu: 0.0.40
codegen_flags: <defaults>
</compile_context>

<pallas_src>
import functools

import jax
import jax.numpy as jnp
from jax.experimental import pallas as pl
from jax.experimental.pallas import tpu as pltpu


def _round_up(a, b):
    return (a + b - 1) // b * b


def _fourier_kan_kernel(x_ref, w_ref, bias_ref, o_ref, *, gridsize):
    # x_ref   : (tm, I)            float32
    # w_ref   : (2*G*I, O_pad)     f32 or bf16   W[(d*G+k)*I + i, j] = C[d, j, i, k]
    # bias_ref: (1, O_pad)         float32
    # o_ref   : (tm, O_pad)        float32
    x = x_ref[...]                                   # (tm, I), lane-dense

    # Base harmonics on the EUP, higher harmonics via VPU angle-addition recurrence.
    c1 = jnp.cos(x)
    s1 = jnp.sin(x)
    cos_blocks = [c1]
    sin_blocks = [s1]
    ck, sk = c1, s1
    for _ in range(gridsize - 1):
        ck_next = ck * c1 - sk * s1                  # cos((k+1)x)
        sk_next = sk * c1 + ck * s1                  # sin((k+1)x)
        ck, sk = ck_next, sk_next
        cos_blocks.append(ck)
        sin_blocks.append(sk)

    # Lane-dense feature slab (tm, 2*G*I); column index = (d*G + k)*I + i.
    feats = jnp.concatenate(cos_blocks + sin_blocks, axis=-1)
    feats = feats.astype(w_ref.dtype)

    acc = jnp.dot(feats, w_ref[...], preferred_element_type=jnp.float32)
    acc += bias_ref[...]                             # (1, O_pad) broadcasts over tm
    o_ref[...] = acc.astype(o_ref.dtype)


def fourier_kan_forward(x, fouriercoeffs, bias=None, *, gridsize, tm=256,
                        feature_dtype=jnp.float32):
    """x: (..., inputdim); fouriercoeffs: (2, outdim, inputdim, gridsize); bias: (1, outdim) or None."""
    *lead, inputdim = x.shape
    outdim = fouriercoeffs.shape[1]

    x2d = x.reshape(-1, inputdim).astype(jnp.float32)
    n = x2d.shape[0]

    # Row tiling: pad N up to a multiple of the tile instead of asserting.
    tm_eff = min(tm, _round_up(max(n, 8), 8))
    n_pad = _round_up(n, tm_eff)
    if n_pad != n:
        x2d = jnp.pad(x2d, ((0, n_pad - n), (0, 0)))   # padded rows: cos(0)=1,sin(0)=0, sliced off

    # Lane-dense output: pad outdim to a multiple of 128 (zero weight cols / zero bias).
    o_pad = _round_up(outdim, 128)

    # Fused weight:  W[(d*G + k)*I + i, j] = C[d, j, i, k]
    k_dim = 2 * gridsize * inputdim
    w = jnp.transpose(fouriercoeffs, (0, 3, 2, 1)).reshape(k_dim, outdim)
    w = w.astype(feature_dtype)
    if o_pad != outdim:
        w = jnp.pad(w, ((0, 0), (0, o_pad - outdim)))

    if bias is None:
        bias2d = jnp.zeros((1, o_pad), jnp.float32)
    else:
        bias2d = jnp.pad(bias.reshape(1, outdim).astype(jnp.float32),
                         ((0, 0), (0, o_pad - outdim)))

    kernel = functools.partial(_fourier_kan_kernel, gridsize=gridsize)

    out = pl.pallas_call(
        kernel,
        out_shape=jax.ShapeDtypeStruct((n_pad, o_pad), jnp.float32),
        grid_spec=pltpu.PrefetchScalarGridSpec(
            num_scalar_prefetch=0,
            grid=(n_pad // tm_eff,),
            in_specs=[
                pl.BlockSpec((tm_eff, inputdim), lambda b: (b, 0)),
                pl.BlockSpec((k_dim, o_pad), lambda b: (0, 0)),   # weight resident
                pl.BlockSpec((1, o_pad), lambda b: (0, 0)),
            ],
            out_specs=pl.BlockSpec((tm_eff, o_pad), lambda b: (b, 0)),
        ),
        compiler_params=pltpu.CompilerParams(
            dimension_semantics=("parallel",),        # megacore sharding on v7x
        ),
    )(x2d, w, bias2d)

    return out[:n, :outdim].reshape(*lead, outdim)


def fourier_kan_reference(x, fouriercoeffs, bias, *, gridsize):
    """Pure-JAX reference mirroring the PyTorch forward."""
    *lead, inputdim = x.shape
    outdim = fouriercoeffs.shape[1]
    x2d = x.reshape(-1, inputdim)
    k = jnp.arange(1, gridsize + 1, dtype=jnp.float32).reshape(1, 1, gridsize)
    xr = x2d.reshape(x2d.shape[0], inputdim, 1)
    c = jnp.cos(k * xr)  # (B, I, G)
    s = jnp.sin(k * xr)
    cs = jnp.stack([c, s], axis=0)                    # (2, B, I, G)
    y = jnp.einsum("dbik,djik->bj", cs, fouriercoeffs)
    if bias is not None:
        y = y + bias.reshape(1, outdim)
    return y.reshape(*lead, outdim)


if __name__ == "__main__":
    # Module config (deterministic synthetic init, no checkpoint load).
    inputdim, outdim, gridsize = 32, 16, 5
    batch, seq = 2, 8                      # flattened rows N = 16

    key = jax.random.PRNGKey(0)
    kx, kc = jax.random.split(key)

    x = jax.random.normal(kx, (batch, seq, inputdim), dtype=jnp.float32)
    # fouriercoeffs ~ randn(2, outdim, inputdim, gridsize) / (sqrt(inputdim)*sqrt(gridsize))
    fouriercoeffs = (
        jax.random.normal(kc, (2, outdim, inputdim, gridsize), dtype=jnp.float32)
        / (jnp.sqrt(jnp.float32(inputdim)) * jnp.sqrt(jnp.float32(gridsize)))
    )
    bias = jnp.zeros((1, outdim), dtype=jnp.float32)

    y_ref = fourier_kan_reference(x, fouriercoeffs, bias, gridsize=gridsize)

    # Full-precision path (default): tight tolerance.
    y = fourier_kan_forward(x, fouriercoeffs, bias, gridsize=gridsize)
    y = jax.block_until_ready(y)
    assert y.shape == (batch, seq, outdim)
    assert jnp.allclose(y, y_ref, atol=1e-4, rtol=1e-4), "f32 mismatch vs reference"

    # bf16 feature/weight path (v6e/v7x MXU throughput): looser tolerance.
    y_bf16 = fourier_kan_forward(x, fouriercoeffs, bias, gridsize=gridsize,
                                 feature_dtype=jnp.bfloat16)
    y_bf16 = jax.block_until_ready(y_bf16)
    assert jnp.allclose(y_bf16, y_ref, atol=3e-2, rtol=3e-2), "bf16 mismatch vs reference"

    print("KERNEL_OK")
</pallas_src>

<mosaic_0001>
module attributes {stable_mosaic.version = 11 : i64} {
  func.func @_fourier_kan_kernel(%arg0: i32, %arg1: memref<16x32xf32, #tpu.memory_space<vmem>>, %arg2: memref<320x128xf32, #tpu.memory_space<vmem>>, %arg3: memref<1x128xf32, #tpu.memory_space<vmem>>, %arg4: memref<16x128xf32, #tpu.memory_space<vmem>>) attributes {dimension_semantics = [#tpu.dimension_semantics<parallel>], iteration_bounds = array<i64: 1>, scalar_prefetch = 0 : i64, scratch_operands = 0 : i64, tpu.core_type = #tpu.core_type<tc>, window_params = [{transform_indices = @transform_0, window_bounds = array<i64: 16, 32>}, {pipeline_mode = #tpu.pipeline_mode<synchronous>, transform_indices = @transform_1, window_bounds = array<i64: 320, 128>}, {pipeline_mode = #tpu.pipeline_mode<synchronous>, transform_indices = @transform_2, window_bounds = array<i64: 1, 128>}, {transform_indices = @transform_3, window_bounds = array<i64: 16, 128>}]} {
    %c0 = arith.constant 0 : index
    %c0_0 = arith.constant 0 : index
    %0 = vector.load %arg1[%c0, %c0_0] : memref<16x32xf32, #tpu.memory_space<vmem>>, vector<16x32xf32>
    %1 = math.cos %0 : vector<16x32xf32>
    %2 = math.sin %0 : vector<16x32xf32>
    %3 = arith.mulf %1, %1 : vector<16x32xf32>
    %4 = arith.mulf %2, %2 : vector<16x32xf32>
    %5 = arith.subf %3, %4 : vector<16x32xf32>
    %6 = arith.mulf %2, %1 : vector<16x32xf32>
    %7 = arith.mulf %1, %2 : vector<16x32xf32>
    %8 = arith.addf %6, %7 : vector<16x32xf32>
    %9 = arith.mulf %5, %1 : vector<16x32xf32>
    %10 = arith.mulf %8, %2 : vector<16x32xf32>
    %11 = arith.subf %9, %10 : vector<16x32xf32>
    %12 = arith.mulf %8, %1 : vector<16x32xf32>
    %13 = arith.mulf %5, %2 : vector<16x32xf32>
    %14 = arith.addf %12, %13 : vector<16x32xf32>
    %15 = arith.mulf %11, %1 : vector<16x32xf32>
    %16 = arith.mulf %14, %2 : vector<16x32xf32>
    %17 = arith.subf %15, %16 : vector<16x32xf32>
    %18 = arith.mulf %14, %1 : vector<16x32xf32>
    %19 = arith.mulf %11, %2 : vector<16x32xf32>
    %20 = arith.addf %18, %19 : vector<16x32xf32>
    %21 = arith.mulf %17, %1 : vector<16x32xf32>
    %22 = arith.mulf %20, %2 : vector<16x32xf32>
    %23 = arith.subf %21, %22 : vector<16x32xf32>
    %24 = arith.mulf %20, %1 : vector<16x32xf32>
    %25 = arith.mulf %17, %2 : vector<16x32xf32>
    %26 = arith.addf %24, %25 : vector<16x32xf32>
    %27 = tpu.concatenate %1, %5, %11, %17, %23, %2, %8, %14, %20, %26 in 1 : vector<16x32xf32>, vector<16x32xf32>, vector<16x32xf32>, vector<16x32xf32>, vector<16x32xf32>, vector<16x32xf32>, vector<16x32xf32>, vector<16x32xf32>, vector<16x32xf32>, vector<16x32xf32> -> vector<16x320xf32>
    %c0_1 = arith.constant 0 : index
    %c0_2 = arith.constant 0 : index
    %28 = vector.load %arg2[%c0_1, %c0_2] : memref<320x128xf32, #tpu.memory_space<vmem>>, vector<320x128xf32>
    %cst = arith.constant dense<0.000000e+00> : vector<16x128xf32>
    %29 = tpu.matmul %27, %28, %cst {dimension_numbers = #tpu.dot_dimension_numbers<[1], [0], [0], [1], [0, 0, 1, 1], [], []>} : vector<16x320xf32>, vector<320x128xf32>, vector<16x128xf32> -> vector<16x128xf32>
    %c0_3 = arith.constant 0 : index
    %c0_4 = arith.constant 0 : index
    %30 = vector.load %arg3[%c0_3, %c0_4] : memref<1x128xf32, #tpu.memory_space<vmem>>, vector<1x128xf32>
    %31 = vector.broadcast %30 : vector<1x128xf32> to vector<16x128xf32>
    %32 = arith.addf %29, %31 : vector<16x128xf32>
    %c0_5 = arith.constant 0 : index
    %c0_6 = arith.constant 0 : index
    %33 = vector.load %arg4[%c0_5, %c0_6] : memref<16x128xf32, #tpu.memory_space<vmem>>, vector<16x128xf32>
    tpu.vector_store %arg4[%c0_5, %c0_6], %32 {strides = array<i32>} : memref<16x128xf32, #tpu.memory_space<vmem>>, vector<16x128xf32>,
    return
  }
  func.func @transform_0(%arg0: i32) -> (i32, i32) {
    %c0_i32 = arith.constant 0 : i32
    %c0_i32_0 = arith.constant 0 : i32
    return %arg0, %c0_i32 : i32, i32
  }
  func.func @transform_1(%arg0: i32) -> (i32, i32) {
    %c0_i32 = arith.constant 0 : i32
    %c0_i32_0 = arith.constant 0 : i32
    %c0_i32_1 = arith.constant 0 : i32
    return %c0_i32, %c0_i32_0 : i32, i32
  }
  func.func @transform_2(%arg0: i32) -> (i32, i32) {
    %c0_i32 = arith.constant 0 : i32
    %c0_i32_0 = arith.constant 0 : i32
    %c0_i32_1 = arith.constant 0 : i32
    return %c0_i32, %c0_i32_0 : i32, i32
  }
  func.func @transform_3(%arg0: i32) -> (i32, i32) {
    %c0_i32 = arith.constant 0 : i32
    %c0_i32_0 = arith.constant 0 : i32
    return %arg0, %c0_i32 : i32, i32
  }
}

</mosaic_0001>

<llo_original>
// kernel: tpu_custom_call.1
$region0: #{tpu_custom_call.1}
  #allocation0 [shape = 'u32[]', space=smem, size = 0x4, offset = 0x4, fixed_abs, tag = 'smem constant byte address 0x4 - core index']
  #allocation1 [shape = 'u32[144,128]{1,0:T(1,128)}', space=vmem, size = 0x12000, scoped, tag = 'internal scratch']
  %s0 = inlined_call_operand.hbm [shape: f32[16,32], index: 0, kind: input, shape index: {}]
  %s1 = inlined_call_operand.hbm [shape: f32[320,128], index: 1, kind: input, shape index: {}]
  %s2 = inlined_call_operand.vmem [shape: f32[1,128], index: 2, kind: input, shape index: {}]
  %s3 = inlined_call_operand.hbm [shape: f32[16,128], index: 3, kind: output, shape index: {}]
  %s4 = sld [smem:[#allocation0]]
  $region30: #{tpu_custom_call.1} parent=0
    _
  %s6 = ssub.s32 1, %s4
  %s7 = scalar_select 0, %s6, %s4
  $region1: #{tpu_custom_call.1} parent=0
    #allocation2 [shape = 'u8[8192]{0}', space=vmem, size = 0x2000, scoped, tag = 'input window, operand 0, single buffered']
    #allocation3 [shape = 's32[1]{0}', space=sflag, size = 0x4, scoped, tag = 'scoped memory for tpu_custom_call.1']
    #allocation4 [shape = 's32[1]{0}', space=sflag, size = 0x4, scoped, tag = 'scoped memory for tpu_custom_call.1']
    #allocation5 [shape = 'u8[163840]{0}', space=vmem, size = 0x28000, scoped, tag = 'input window, operand 1, single buffered']
    #allocation6 [shape = 's32[1]{0}', space=sflag, size = 0x4, scoped, tag = 'scoped memory for tpu_custom_call.1']
    #allocation7 [shape = 'u8[8192]{0}', space=vmem, size = 0x2000, scoped, tag = 'output window, operand 0, single buffered']
    %8 = vsyncpa [#allocation3], 0
    %9 = vsyncpa [#allocation6], 0
    %10 = vsyncpa [#allocation4], 0
    // Predicated region
    $region2: #{tpu_custom_call.1} parent=1 // pred_check
      _
    $region3: #{tpu_custom_call.1} parent=1 // pred_check_branch
      %12 = sbr.rel (0) target = $region5
    $region4: #{tpu_custom_call.1} parent=1 // pred_region
      %s14 = ssub.s32 256, 256
      %15 = vsyncadd [#allocation3], %s14
      %s16 = sshll.u32 [#allocation2], 4
      %s17 = int_to_ptr.vmem [resolvable:$true] %s16
      %22 = dma.hbm_to_vmem [thread:$0]  %s0, 256, %s17, [#allocation3], 128, 128, 8
    $region5: #{tpu_custom_call.1} parent=1 // pred_fallthru
      _
    // Predicated region
    $region6: #{tpu_custom_call.1} parent=1 // pred_check
      _
    $region7: #{tpu_custom_call.1} parent=1 // pred_check_branch
      %24 = sbr.rel (0) target = $region9
    $region8: #{tpu_custom_call.1} parent=1 // pred_region
      %s26 = ssub.s32 5120, 5120
      %27 = vsyncadd [#allocation6], %s26
      %s28 = sshll.u32 [#allocation5], 4
      %s29 = int_to_ptr.vmem [resolvable:$true] %s28
      %34 = dma.hbm_to_vmem [thread:$0]  %s1, 5120, %s29, [#allocation6], 128, 128, 8
    $region9: #{tpu_custom_call.1} parent=1 // pred_fallthru
      _
    // Predicated region
    $region10: #{tpu_custom_call.1} parent=1 // pred_check
      _
    $region11: #{tpu_custom_call.1} parent=1 // pred_check_branch
      %36 = sbr.rel (0) target = $region13
    $region12: #{tpu_custom_call.1} parent=1 // pred_region
      _
    $region13: #{tpu_custom_call.1} parent=1 // pred_fallthru
      _
    // Predicated region
    $region14: #{tpu_custom_call.1} parent=1 // pred_check
      _
    $region15: #{tpu_custom_call.1} parent=1 // pred_check_branch
      %38 = sbr.rel (0) target = $region17
    $region16: #{tpu_custom_call.1} parent=1 // pred_region
      %39 = dma.done [#allocation3], 256
    $region17: #{tpu_custom_call.1} parent=1 // pred_fallthru
      _
    // Predicated region
    $region18: #{tpu_custom_call.1} parent=1 // pred_check
      _
    $region19: #{tpu_custom_call.1} parent=1 // pred_check_branch
      %41 = sbr.rel (0) target = $region21
    $region20: #{tpu_custom_call.1} parent=1 // pred_region
      %42 = dma.done [#allocation6], 5120
    $region21: #{tpu_custom_call.1} parent=1 // pred_fallthru
      _
    %v43 = vld [vmem:[#allocation2] sm:$0xff]
    %v44 = vld [vmem:[#allocation2 + $0x8] sm:$0xff]
    %v45 = vand.u32 2147483647, %v43
    %vm46 = vcmp.le.f32.partialorder %v45, 0.7853982
    %vm47 = vcmp.lt.s32.totalorder %v43, 0
    %v48 = vand.u32 %v43, 2139095040
    %v49 = vshrl.u32 %v48, 23
    %v50 = vsub.s32 %v49, 127
    %v51 = vand.u32 2147483647, %v43
    %v52 = vand.u32 %v51, 8388607
    %v53 = vor.u32 %v52, 8388608
    %v54 = vsub.s32 0, %v53
    %v55 = vadd.s32 %v50, 1
    %vm56 = vcmp.gt.s32.totalorder %v55, 0
    %v57 = vsel %vm56, %v55, 0
    %v58 = vshrl.u32 %v57, 5
    %v59 = vand.u32 %v57, 31
    %v60 = vsub.s32 32, %v59
    %v61 = vshrl.u32 683565275, %v60
    %v62 = vshll.u32 683565275, %v59
    %v63 = vshrl.u32 2475754826, %v60
    %v64 = vor.u32 %v62, %v63
    %v65 = vshll.u32 2475754826, %v59
    %v66 = vshrl.u32 2131351028, %v60
    %v67 = vor.u32 %v65, %v66
    %v68 = vshll.u32 2131351028, %v59
    %v69 = vshrl.u32 2102212464, %v60
    %v70 = vor.u32 %v68, %v69
    %v71 = vshll.u32 2102212464, %v59
    %v72 = vshrl.u32 920167782, %v60
    %v73 = vor.u32 %v71, %v72
    %v74 = vshll.u32 920167782, %v59
    %v75 = vshrl.u32 1326507024, %v60
    %v76 = vor.u32 %v74, %v75
    %vm77 = vcmp.lt.s32.totalorder %v58, 1
    %vm78 = vcmp.lt.s32.totalorder %v58, 2
    %vm79 = vcmp.lt.s32.totalorder %v58, 3
    %vm80 = vcmp.lt.s32.totalorder %v58, 4
    %v81 = vsel %vm77, %v61, %v64
    %v82 = vsel %vm80, %v70, 2102212464
    %v83 = vsel %vm79, %v67, %v82
    %v84 = vsel %vm78, %v81, %v83
    %v85 = vsel %vm77, %v64, %v67
    %v86 = vsel %vm80, %v73, 920167782
    %v87 = vsel %vm79, %v70, %v86
    %v88 = vsel %vm78, %v85, %v87
    %v89 = vsel %vm77, %v67, %v70
    %v90 = vsel %vm80, %v76, 1326507024
    %v91 = vsel %vm79, %v73, %v90
    %v92 = vsel %vm78, %v89, %v91
    %v93 = vshll.u32 %v53, 8
    %v94 = vmul.u32.u64.compose %v93, %v92
    %v95 = vextract.low.u32 %v94
    %v96 = vextract.high.u32 %v94
    %v97 = vmul.u32.u64.compose %v93, %v88
    %v98 = vextract.low.u32 %v97
    %v99 = vextract.high.u32 %v97
    %v100 = vmul.u32 %v93, %v84
    %v101 = vadd.s32 %v96, %v98
    %vm102 = vc.u32 %v96, %v98
    %v103 = vadd.s32 %v99, 1
    %v104 = vsel %vm102, %v103, %v99
    %v105 = vadd.s32 %v100, %v104
    %v106 = vadd.s32 %v105, 536870912
    %v107 = vshrl.u32 %v106, 30
    %v108 = vshll.u32 %v107, 30
    %v109 = vsub.s32 %v105, %v108
    %vm110 = vcmp.lt.s32.totalorder %v109, 0
    %v111 = vsub.s32 0, %v109
    %v112 = vsel %vm110, %v111, %v109
    %v113 = vclz %v112
    %v114 = vsub.s32 %v113, 2
    %vm115 = vcmp.gt.s32.totalorder 0, %v114
    %v116 = vsel %vm115, 0, %v114
    %v117 = vsub.s32 32, %v116
    %v118 = vshll.u32 %v109, %v116
    %v119 = vshrl.u32 %v101, %v117
    %v120 = vor.u32 %v118, %v119
    %v121 = vsub.s32 4294967266, %v116
    %v122 = vadd.s32 %v121, 127
    %v123 = vshll.u32 %v122, 23
    %v124 = vor.u32 4788187, %v123
    %v125 = vand.u32 2147483647, %v124
    %v127 = vcvt.s32.f32 %v120
    %v128 = vmul.f32 %v127, %v125
    %v129 = vxor.u32 %v128, 2147483648
    %v130 = vsel %vm47, %v129, %v128
    %v131 = vsub.s32 4, %v107
    %v132 = vsel %vm47, %v131, %v107
    %v133 = vsel %vm46, %v43, %v130
    %v134 = vsel %vm46, 0, %v132
    %v135 = vcosq.f32.pop %v133
    %v136 = vsinq.f32.pop %v133
    %vm137 = vweird.f32 %v43
    %v138 = vand.u32 %v134, 3
    %vm139 = vcmp.lt.s32.totalorder %v138, 2
    %vm140 = vcmp.eq.s32.totalorder %v138, 0
    %v141 = vxor.u32 %v136, 2147483648
    %v142 = vsel %vm140, %v135, %v141
    %vm143 = vcmp.eq.s32.totalorder %v138, 2
    %v144 = vxor.u32 %v135, 2147483648
    %v145 = vsel %vm143, %v144, %v136
    %v146 = vsel %vm139, %v142, %v145
    %v147 = vsel %vm137, nan, %v146
    %v148 = vand.u32 2147483647, %v44
    %vm149 = vcmp.le.f32.partialorder %v148, 0.7853982
    %vm150 = vcmp.lt.s32.totalorder %v44, 0
    %v151 = vand.u32 %v44, 2139095040
    %v152 = vshrl.u32 %v151, 23
    %v153 = vsub.s32 %v152, 127
    %v154 = vand.u32 2147483647, %v44
    %v155 = vand.u32 %v154, 8388607
    %v156 = vor.u32 %v155, 8388608
    %v157 = vsub.s32 0, %v156
    %v158 = vadd.s32 %v153, 1
    %vm159 = vcmp.gt.s32.totalorder %v158, 0
    %v160 = vsel %vm159, %v158, 0
    %v161 = vshrl.u32 %v160, 5
    %v162 = vand.u32 %v160, 31
    %v163 = vsub.s32 32, %v162
    %v164 = vshrl.u32 683565275, %v163
    %v165 = vshll.u32 683565275, %v162
    %v166 = vshrl.u32 2475754826, %v163
    %v167 = vor.u32 %v165, %v166
    %v168 = vshll.u32 2475754826, %v162
    %v169 = vshrl.u32 2131351028, %v163
    %v170 = vor.u32 %v168, %v169
    %v171 = vshll.u32 2131351028, %v162
    %v172 = vshrl.u32 2102212464, %v163
    %v173 = vor.u32 %v171, %v172
    %v174 = vshll.u32 2102212464, %v162
    %v175 = vshrl.u32 920167782, %v163
    %v176 = vor.u32 %v174, %v175
    %v177 = vshll.u32 920167782, %v162
    %v178 = vshrl.u32 1326507024, %v163
    %v179 = vor.u32 %v177, %v178
    %vm180 = vcmp.lt.s32.totalorder %v161, 1
    %vm181 = vcmp.lt.s32.totalorder %v161, 2
    %vm182 = vcmp.lt.s32.totalorder %v161, 3
    %vm183 = vcmp.lt.s32.totalorder %v161, 4
    %v184 = vsel %vm180, %v164, %v167
    %v185 = vsel %vm183, %v173, 2102212464
    %v186 = vsel %vm182, %v170, %v185
    %v187 = vsel %vm181, %v184, %v186
    %v188 = vsel %vm180, %v167, %v170
    %v189 = vsel %vm183, %v176, 920167782
    %v190 = vsel %vm182, %v173, %v189
    %v191 = vsel %vm181, %v188, %v190
    %v192 = vsel %vm180, %v170, %v173
    %v193 = vsel %vm183, %v179, 1326507024
    %v194 = vsel %vm182, %v176, %v193
    %v195 = vsel %vm181, %v192, %v194
    %v196 = vshll.u32 %v156, 8
    %v197 = vmul.u32.u64.compose %v196, %v195
    %v198 = vextract.low.u32 %v197
    %v199 = vextract.high.u32 %v197
    %v200 = vmul.u32.u64.compose %v196, %v191
    %v201 = vextract.low.u32 %v200
    %v202 = vextract.high.u32 %v200
    %v203 = vmul.u32 %v196, %v187
    %v204 = vadd.s32 %v199, %v201
    %vm205 = vc.u32 %v199, %v201
    %v206 = vadd.s32 %v202, 1
    %v207 = vsel %vm205, %v206, %v202
    %v208 = vadd.s32 %v203, %v207
    %v209 = vadd.s32 %v208, 536870912
    %v210 = vshrl.u32 %v209, 30
    %v211 = vshll.u32 %v210, 30
    %v212 = vsub.s32 %v208, %v211
    %vm213 = vcmp.lt.s32.totalorder %v212, 0
    %v214 = vsub.s32 0, %v212
    %v215 = vsel %vm213, %v214, %v212
    %v216 = vclz %v215
    %v217 = vsub.s32 %v216, 2
    %vm218 = vcmp.gt.s32.totalorder 0, %v217
    %v219 = vsel %vm218, 0, %v217
    %v220 = vsub.s32 32, %v219
    %v221 = vshll.u32 %v212, %v219
    %v222 = vshrl.u32 %v204, %v220
    %v223 = vor.u32 %v221, %v222
    %v224 = vsub.s32 4294967266, %v219
    %v225 = vadd.s32 %v224, 127
    %v226 = vshll.u32 %v225, 23
    %v227 = vor.u32 4788187, %v226
    %v228 = vand.u32 2147483647, %v227
    %v230 = vcvt.s32.f32 %v223
    %v231 = vmul.f32 %v230, %v228
    %v232 = vxor.u32 %v231, 2147483648
    %v233 = vsel %vm150, %v232, %v231
    %v234 = vsub.s32 4, %v210
    %v235 = vsel %vm150, %v234, %v210
    %v236 = vsel %vm149, %v44, %v233
    %v237 = vsel %vm149, 0, %v235
    %v238 = vcosq.f32.pop %v236
    %v239 = vsinq.f32.pop %v236
    %vm240 = vweird.f32 %v44
    %v241 = vand.u32 %v237, 3
    %vm242 = vcmp.lt.s32.totalorder %v241, 2
    %vm243 = vcmp.eq.s32.totalorder %v241, 0
    %v244 = vxor.u32 %v239, 2147483648
    %v245 = vsel %vm243, %v238, %v244
    %vm246 = vcmp.eq.s32.totalorder %v241, 2
    %v247 = vxor.u32 %v238, 2147483648
    %v248 = vsel %vm246, %v247, %v239
    %v249 = vsel %vm242, %v245, %v248
    %v250 = vsel %vm240, nan, %v249
    %v251 = vand.u32 2147483647, %v43
    %vm252 = vcmp.le.f32.partialorder %v251, 0.7853982
    %vm253 = vcmp.lt.s32.totalorder %v43, 0
    %v254 = vand.u32 %v43, 2139095040
    %v255 = vshrl.u32 %v254, 23
    %v256 = vsub.s32 %v255, 127
    %v257 = vand.u32 2147483647, %v43
    %v258 = vand.u32 %v257, 8388607
    %v259 = vor.u32 %v258, 8388608
    %v260 = vsub.s32 0, %v259
    %v261 = vadd.s32 %v256, 1
    %vm262 = vcmp.gt.s32.totalorder %v261, 0
    %v263 = vsel %vm262, %v261, 0
    %v264 = vshrl.u32 %v263, 5
    %v265 = vand.u32 %v263, 31
    %v266 = vsub.s32 32, %v265
    %v267 = vshrl.u32 683565275, %v266
    %v268 = vshll.u32 683565275, %v265
    %v269 = vshrl.u32 2475754826, %v266
    %v270 = vor.u32 %v268, %v269
    %v271 = vshll.u32 2475754826, %v265
    %v272 = vshrl.u32 2131351028, %v266
    %v273 = vor.u32 %v271, %v272
    %v274 = vshll.u32 2131351028, %v265
    %v275 = vshrl.u32 2102212464, %v266
    %v276 = vor.u32 %v274, %v275
    %v277 = vshll.u32 2102212464, %v265
    %v278 = vshrl.u32 920167782, %v266
    %v279 = vor.u32 %v277, %v278
    %v280 = vshll.u32 920167782, %v265
    %v281 = vshrl.u32 1326507024, %v266
    %v282 = vor.u32 %v280, %v281
    %vm283 = vcmp.lt.s32.totalorder %v264, 1
    %vm284 = vcmp.lt.s32.totalorder %v264, 2
    %vm285 = vcmp.lt.s32.totalorder %v264, 3
    %vm286 = vcmp.lt.s32.totalorder %v264, 4
    %v287 = vsel %vm283, %v267, %v270
    %v288 = vsel %vm286, %v276, 2102212464
    %v289 = vsel %vm285, %v273, %v288
    %v290 = vsel %vm284, %v287, %v289
    %v291 = vsel %vm283, %v270, %v273
    %v292 = vsel %vm286, %v279, 920167782
    %v293 = vsel %vm285, %v276, %v292
    %v294 = vsel %vm284, %v291, %v293
    %v295 = vsel %vm283, %v273, %v276
    %v296 = vsel %vm286, %v282, 1326507024
    %v297 = vsel %vm285, %v279, %v296
    %v298 = vsel %vm284, %v295, %v297
    %v299 = vshll.u32 %v259, 8
    %v300 = vmul.u32.u64.compose %v299, %v298
    %v301 = vextract.low.u32 %v300
    %v302 = vextract.high.u32 %v300
    %v303 = vmul.u32.u64.compose %v299, %v294
    %v304 = vextract.low.u32 %v303
    %v305 = vextract.high.u32 %v303
    %v306 = vmul.u32 %v299, %v290
    %v307 = vadd.s32 %v302, %v304
    %vm308 = vc.u32 %v302, %v304
    %v309 = vadd.s32 %v305, 1
    %v310 = vsel %vm308, %v309, %v305
    %v311 = vadd.s32 %v306, %v310
    %v312 = vadd.s32 %v311, 536870912
    %v313 = vshrl.u32 %v312, 30
    %v314 = vshll.u32 %v313, 30
    %v315 = vsub.s32 %v311, %v314
    %vm316 = vcmp.lt.s32.totalorder %v315, 0
    %v317 = vsub.s32 0, %v315
    %v318 = vsel %vm316, %v317, %v315
    %v319 = vclz %v318
    %v320 = vsub.s32 %v319, 2
    %vm321 = vcmp.gt.s32.totalorder 0, %v320
    %v322 = vsel %vm321, 0, %v320
    %v323 = vsub.s32 32, %v322
    %v324 = vshll.u32 %v315, %v322
    %v325 = vshrl.u32 %v307, %v323
    %v326 = vor.u32 %v324, %v325
    %v327 = vsub.s32 4294967266, %v322
    %v328 = vadd.s32 %v327, 127
    %v329 = vshll.u32 %v328, 23
    %v330 = vor.u32 4788187, %v329
    %v331 = vand.u32 2147483647, %v330
    %v333 = vcvt.s32.f32 %v326
    %v334 = vmul.f32 %v333, %v331
    %v335 = vxor.u32 %v334, 2147483648
    %v336 = vsel %vm253, %v335, %v334
    %v337 = vsub.s32 4, %v313
    %v338 = vsel %vm253, %v337, %v313
    %v339 = vsel %vm252, %v43, %v336
    %v340 = vsel %vm252, 0, %v338
    %v341 = vcosq.f32.pop %v339
    %v342 = vsinq.f32.pop %v339
    %vm343 = vweird.f32 %v43
    %v344 = vadd.s32 %v340, 3
    %v345 = vand.u32 %v344, 3
    %vm346 = vcmp.lt.s32.totalorder %v345, 2
    %vm347 = vcmp.eq.s32.totalorder %v345, 0
    %v348 = vxor.u32 %v342, 2147483648
    %v349 = vsel %vm347, %v341, %v348
    %vm350 = vcmp.eq.s32.totalorder %v345, 2
    %v351 = vxor.u32 %v341, 2147483648
    %v352 = vsel %vm350, %v351, %v342
    %v353 = vsel %vm346, %v349, %v352
    %v354 = vsel %vm343, nan, %v353
    %v355 = vand.u32 2147483647, %v44
    %vm356 = vcmp.le.f32.partialorder %v355, 0.7853982
    %vm357 = vcmp.lt.s32.totalorder %v44, 0
    %v358 = vand.u32 %v44, 2139095040
    %v359 = vshrl.u32 %v358, 23
    %v360 = vsub.s32 %v359, 127
    %v361 = vand.u32 2147483647, %v44
    %v362 = vand.u32 %v361, 8388607
    %v363 = vor.u32 %v362, 8388608
    %v364 = vsub.s32 0, %v363
    %v365 = vadd.s32 %v360, 1
    %vm366 = vcmp.gt.s32.totalorder %v365, 0
    %v367 = vsel %vm366, %v365, 0
    %v368 = vshrl.u32 %v367, 5
    %v369 = vand.u32 %v367, 31
    %v370 = vsub.s32 32, %v369
    %v371 = vshrl.u32 683565275, %v370
    %v372 = vshll.u32 683565275, %v369
    %v373 = vshrl.u32 2475754826, %v370
    %v374 = vor.u32 %v372, %v373
    %v375 = vshll.u32 2475754826, %v369
    %v376 = vshrl.u32 2131351028, %v370
    %v377 = vor.u32 %v375, %v376
    %v378 = vshll.u32 2131351028, %v369
    %v379 = vshrl.u32 2102212464, %v370
    %v380 = vor.u32 %v378, %v379
    %v381 = vshll.u32 2102212464, %v369
    %v382 = vshrl.u32 920167782, %v370
    %v383 = vor.u32 %v381, %v382
    %v384 = vshll.u32 920167782, %v369
    %v385 = vshrl.u32 1326507024, %v370
    %v386 = vor.u32 %v384, %v385
    %vm387 = vcmp.lt.s32.totalorder %v368, 1
    %vm388 = vcmp.lt.s32.totalorder %v368, 2
    %vm389 = vcmp.lt.s32.totalorder %v368, 3
    %vm390 = vcmp.lt.s32.totalorder %v368, 4
    %v391 = vsel %vm387, %v371, %v374
    %v392 = vsel %vm390, %v380, 2102212464
    %v393 = vsel %vm389, %v377, %v392
    %v394 = vsel %vm388, %v391, %v393
    %v395 = vsel %vm387, %v374, %v377
    %v396 = vsel %vm390, %v383, 920167782
    %v397 = vsel %vm389, %v380, %v396
    %v398 = vsel %vm388, %v395, %v397
    %v399 = vsel %vm387, %v377, %v380
    %v400 = vsel %vm390, %v386, 1326507024
    %v401 = vsel %vm389, %v383, %v400
    %v402 = vsel %vm388, %v399, %v401
    %v403 = vshll.u32 %v363, 8
    %v404 = vmul.u32.u64.compose %v403, %v402
    %v405 = vextract.low.u32 %v404
    %v406 = vextract.high.u32 %v404
    %v407 = vmul.u32.u64.compose %v403, %v398
    %v408 = vextract.low.u32 %v407
    %v409 = vextract.high.u32 %v407
    %v410 = vmul.u32 %v403, %v394
    %v411 = vadd.s32 %v406, %v408
    %vm412 = vc.u32 %v406, %v408
    %v413 = vadd.s32 %v409, 1
    %v414 = vsel %vm412, %v413, %v409
    %v415 = vadd.s32 %v410, %v414
    %v416 = vadd.s32 %v415, 536870912
    %v417 = vshrl.u32 %v416, 30
    %v418 = vshll.u32 %v417, 30
    %v419 = vsub.s32 %v415, %v418
    %vm420 = vcmp.lt.s32.totalorder %v419, 0
    %v421 = vsub.s32 0, %v419
    %v422 = vsel %vm420, %v421, %v419
    %v423 = vclz %v422
    %v424 = vsub.s32 %v423, 2
    %vm425 = vcmp.gt.s32.totalorder 0, %v424
    %v426 = vsel %vm425, 0, %v424
    %v427 = vsub.s32 32, %v426
    %v428 = vshll.u32 %v419, %v426
    %v429 = vshrl.u32 %v411, %v427
    %v430 = vor.u32 %v428, %v429
    %v431 = vsub.s32 4294967266, %v426
    %v432 = vadd.s32 %v431, 127
    %v433 = vshll.u32 %v432, 23
    %v434 = vor.u32 4788187, %v433
    %v435 = vand.u32 2147483647, %v434
    %v437 = vcvt.s32.f32 %v430
    %v438 = vmul.f32 %v437, %v435
    %v439 = vxor.u32 %v438, 2147483648
    %v440 = vsel %vm357, %v439, %v438
    %v441 = vsub.s32 4, %v417
    %v442 = vsel %vm357, %v441, %v417
    %v443 = vsel %vm356, %v44, %v440
    %v444 = vsel %vm356, 0, %v442
    %v445 = vcosq.f32.pop %v443
    %v446 = vsinq.f32.pop %v443
    %vm447 = vweird.f32 %v44
    %v448 = vadd.s32 %v444, 3
    %v449 = vand.u32 %v448, 3
    %vm450 = vcmp.lt.s32.totalorder %v449, 2
    %vm451 = vcmp.eq.s32.totalorder %v449, 0
    %v452 = vxor.u32 %v446, 2147483648
    %v453 = vsel %vm451, %v445, %v452
    %vm454 = vcmp.eq.s32.totalorder %v449, 2
    %v455 = vxor.u32 %v445, 2147483648
    %v456 = vsel %vm454, %v455, %v446
    %v457 = vsel %vm450, %v453, %v456
    %v458 = vsel %vm447, nan, %v457
    %v459 = vmul.f32 %v147, %v147
    %v460 = vmul.f32 %v250, %v250
    %v461 = vmul.f32 %v354, %v354
    %v462 = vmul.f32 %v458, %v458
    %v463 = vsub.f32 %v459, %v461
    %v464 = vsub.f32 %v460, %v462
    %v465 = vmul.f32 %v354, %v147
    %v466 = vmul.f32 %v458, %v250
    %v467 = vadd.f32 %v465, %v465
    %v468 = vadd.f32 %v466, %v466
    %v469 = vmul.f32 %v463, %v147
    %v470 = vmul.f32 %v464, %v250
    %v471 = vmul.f32 %v467, %v354
    %v472 = vmul.f32 %v468, %v458
    %v473 = vsub.f32 %v469, %v471
    %v474 = vsub.f32 %v470, %v472
    %v475 = vmul.f32 %v467, %v147
    %v476 = vmul.f32 %v468, %v250
    %v477 = vmul.f32 %v463, %v354
    %v478 = vmul.f32 %v464, %v458
    %v479 = vadd.f32 %v475, %v477
    %v480 = vadd.f32 %v476, %v478
    %v481 = vmul.f32 %v473, %v147
    %v482 = vmul.f32 %v474, %v250
    %v483 = vmul.f32 %v479, %v354
    %v484 = vmul.f32 %v480, %v458
    %v485 = vsub.f32 %v481, %v483
    %v486 = vsub.f32 %v482, %v484
    %v487 = vmul.f32 %v479, %v147
    %v488 = vmul.f32 %v480, %v250
    %v489 = vmul.f32 %v473, %v354
    %v490 = vmul.f32 %v474, %v458
    %v491 = vadd.f32 %v487, %v489
    %v492 = vadd.f32 %v488, %v490
    %v493 = vmul.f32 %v485, %v147
    %v494 = vmul.f32 %v486, %v250
    %v495 = vmul.f32 %v491, %v354
    %v496 = vmul.f32 %v492, %v458
    %v497 = vsub.f32 %v493, %v495
    %v498 = vsub.f32 %v494, %v496
    %v499 = vmul.f32 %v491, %v147
    %v500 = vmul.f32 %v492, %v250
    %v501 = vmul.f32 %v485, %v354
    %v502 = vmul.f32 %v486, %v458
    %v503 = vadd.f32 %v499, %v501
    %v504 = vadd.f32 %v500, %v502
    %507 = vrot.lane.b32.xlu0 %v463, 32
    %v508 = vpop.permute.xlu0 %507
    %509 = vrot.lane.b32.xlu0 %v464, 32
    %v510 = vpop.permute.xlu0 %509
    %515 = vrot.lane.b32.xlu0 %v473, 64
    %v516 = vpop.permute.xlu0 %515
    %517 = vrot.lane.b32.xlu0 %v474, 64
    %v518 = vpop.permute.xlu0 %517
    %523 = vrot.lane.b32.xlu0 %v485, 96
    %v524 = vpop.permute.xlu0 %523
    %525 = vrot.lane.b32.xlu0 %v486, 96
    %v526 = vpop.permute.xlu0 %525
    %531 = vrot.lane.b32.xlu0 %v354, 32
    %v532 = vpop.permute.xlu0 %531
    %533 = vrot.lane.b32.xlu0 %v458, 32
    %v534 = vpop.permute.xlu0 %533
    %539 = vrot.lane.b32.xlu0 %v467, 64
    %v540 = vpop.permute.xlu0 %539
    %541 = vrot.lane.b32.xlu0 %v468, 64
    %v542 = vpop.permute.xlu0 %541
    %547 = vrot.lane.b32.xlu0 %v479, 96
    %v548 = vpop.permute.xlu0 %547
    %549 = vrot.lane.b32.xlu0 %v480, 96
    %v550 = vpop.permute.xlu0 %549
    %555 = vrot.lane.b32.xlu0 %v503, 32
    %v556 = vpop.permute.xlu0 %555
    %557 = vrot.lane.b32.xlu0 %v504, 32
    %v558 = vpop.permute.xlu0 %557
    %vm561 = vcmask 261120
    %v562 = vsel %vm561, %v147, %v508
    %v563 = vsel %vm561, %v250, %v510
    %vm564 = vcmask 523264
    %v565 = vsel %vm564, %v562, %v516
    %v566 = vsel %vm564, %v563, %v518
    %vm567 = vcmask 785408
    %v568 = vsel %vm567, %v565, %v524
    %v569 = vsel %vm567, %v566, %v526
    %v570 = vsel %vm561, %v497, %v532
    %v571 = vsel %vm561, %v498, %v534
    %v572 = vsel %vm564, %v570, %v540
    %v573 = vsel %vm564, %v571, %v542
    %v574 = vsel %vm567, %v572, %v548
    %v575 = vsel %vm567, %v573, %v550
    %v576 = vsel %vm561, %v491, %v556
    %v577 = vsel %vm561, %v492, %v558
    %v578 = vld [vmem:[#allocation5] sm:$0xff]
    %v579 = vld [vmem:[#allocation5 + $0x8] sm:$0xff]
    %v580 = vld [vmem:[#allocation5 + $0x10] sm:$0xff]
    %v581 = vld [vmem:[#allocation5 + $0x18] sm:$0xff]
    %v582 = vld [vmem:[#allocation5 + $0x20] sm:$0xff]
    %v583 = vld [vmem:[#allocation5 + $0x28] sm:$0xff]
    %v584 = vld [vmem:[#allocation5 + $0x30] sm:$0xff]
    %v585 = vld [vmem:[#allocation5 + $0x38] sm:$0xff]
    %v586 = vld [vmem:[#allocation5 + $0x40] sm:$0xff]
    %v587 = vld [vmem:[#allocation5 + $0x48] sm:$0xff]
    %v588 = vld [vmem:[#allocation5 + $0x50] sm:$0xff]
    %v589 = vld [vmem:[#allocation5 + $0x58] sm:$0xff]
    %v590 = vld [vmem:[#allocation5 + $0x60] sm:$0xff]
    %v591 = vld [vmem:[#allocation5 + $0x68] sm:$0xff]
    %v592 = vld [vmem:[#allocation5 + $0x70] sm:$0xff]
    %v593 = vld [vmem:[#allocation5 + $0x78] sm:$0xff]
    %v594 = vld [vmem:[#allocation5 + $0x80] sm:$0xff]
    %v595 = vld [vmem:[#allocation5 + $0x88] sm:$0xff]
    %v596 = vld [vmem:[#allocation5 + $0x90] sm:$0xff]
    %v597 = vld [vmem:[#allocation5 + $0x98] sm:$0xff]
    %v598 = vld [vmem:[#allocation5 + $0xa0] sm:$0xff]
    %v599 = vld [vmem:[#allocation5 + $0xa8] sm:$0xff]
    %v600 = vld [vmem:[#allocation5 + $0xb0] sm:$0xff]
    %v601 = vld [vmem:[#allocation5 + $0xb8] sm:$0xff]
    %v602 = vld [vmem:[#allocation5 + $0xc0] sm:$0xff]
    %v603 = vld [vmem:[#allocation5 + $0xc8] sm:$0xff]
    %v604 = vld [vmem:[#allocation5 + $0xd0] sm:$0xff]
    %v605 = vld [vmem:[#allocation5 + $0xd8] sm:$0xff]
    %v606 = vld [vmem:[#allocation5 + $0xe0] sm:$0xff]
    %v607 = vld [vmem:[#allocation5 + $0xe8] sm:$0xff]
    %v608 = vld [vmem:[#allocation5 + $0xf0] sm:$0xff]
    %v609 = vld [vmem:[#allocation5 + $0xf8] sm:$0xff]
    %v610 = vld [vmem:[#allocation5 + $0x100] sm:$0xff]
    %v611 = vld [vmem:[#allocation5 + $0x108] sm:$0xff]
    %v612 = vld [vmem:[#allocation5 + $0x110] sm:$0xff]
    %v613 = vld [vmem:[#allocation5 + $0x118] sm:$0xff]
    %v614 = vld [vmem:[#allocation5 + $0x120] sm:$0xff]
    %v615 = vld [vmem:[#allocation5 + $0x128] sm:$0xff]
    %v616 = vld [vmem:[#allocation5 + $0x130] sm:$0xff]
    %v617 = vld [vmem:[#allocation5 + $0x138] sm:$0xff]
    %v618 = vld [vmem:[%s2] sm:$0x1]
    %v620 = vlaneseq
    %v621 = vshrl.u32 %v620, 7
    %v622 = vsub.s32 0, %v621
    %v623 = vrot.slane %v618, %v622
    %v626 = vsel %vm564, %v576, 0
    %v629 = vsel %vm564, %v577, 0
    %631 = vmatprep.subr.mxu0 0.0
    %632 = vmatpush1.msra.mxu0 %v578
    %633 = vmatprep.subr.mxu0 0.0
    %634 = vmatpush1.msra.mxu0 %v579
    %635 = vmatprep.subr.mxu0 0.0
    %636 = vmatpush1.msra.mxu0 %v580
    %637 = vmatprep.subr.mxu0 0.0
    %638 = vmatpush1.msra.mxu0 %v581
    %639 = vmatprep.subr.mxu0 0.0
    %640 = vmatpush1.msra.mxu0 %v582
    %641 = vmatprep.subr.mxu0 0.0
    %642 = vmatpush1.msra.mxu0 %v583
    %643 = vmatprep.subr.mxu0 0.0
    %644 = vmatpush1.msra.mxu0 %v584
    %645 = vmatprep.subr.mxu0 0.0
    %646 = vmatpush1.msra.mxu0 %v585
    %647 = vmatprep.subr.mxu0 0.0
    %648 = vmatpush1.msra.mxu0 %v586
    %649 = vmatprep.subr.mxu0 0.0
    %650 = vmatpush1.msra.mxu0 %v587
    %651 = vmatprep.subr.mxu0 0.0
    %652 = vmatpush1.msra.mxu0 %v588
    %653 = vmatprep.subr.mxu0 0.0
    %654 = vmatpush1.msra.mxu0 %v589
    %655 = vmatprep.subr.mxu0 0.0
    %656 = vmatpush1.msra.mxu0 %v590
    %657 = vmatprep.subr.mxu0 0.0
    %658 = vmatpush1.msra.mxu0 %v591
    %659 = vmatprep.subr.mxu0 0.0
    %660 = vmatpush1.msra.mxu0 %v592
    %661 = vmatprep.subr.mxu0 0.0
    %662 = vmatpush1.msra.mxu0 %v593
    %663 = vmatprep.subr.mxu0 0.0
    %664 = vmatpush1.msra.mxu0 %v594
    %665 = vmatprep.subr.mxu0 0.0
    %666 = vmatpush1.msra.mxu0 %v595
    %667 = vmatprep.subr.mxu0 0.0
    %668 = vmatpush1.msra.mxu0 %v596
    %669 = vmatprep.subr.mxu0 0.0
    %670 = vmatpush1.msra.mxu0 %v597
    %671 = vmatprep.subr.mxu0 0.0
    %672 = vmatpush1.msra.mxu0 %v598
    %673 = vmatprep.subr.mxu0 0.0
    %674 = vmatpush1.msra.mxu0 %v599
    %675 = vmatprep.subr.mxu0 0.0
    %676 = vmatpush1.msra.mxu0 %v600
    %677 = vmatprep.subr.mxu0 0.0
    %678 = vmatpush1.msra.mxu0 %v601
    %679 = vmatprep.subr.mxu0 0.0
    %680 = vmatpush1.msra.mxu0 %v602
    %681 = vmatprep.subr.mxu0 0.0
    %682 = vmatpush1.msra.mxu0 %v603
    %683 = vmatprep.subr.mxu0 0.0
    %684 = vmatpush1.msra.mxu0 %v604
    %685 = vmatprep.subr.mxu0 0.0
    %686 = vmatpush1.msra.mxu0 %v605
    %687 = vmatprep.subr.mxu0 0.0
    %688 = vmatpush1.msra.mxu0 %v606
    %689 = vmatprep.subr.mxu0 0.0
    %690 = vmatpush1.msra.mxu0 %v607
    %691 = vmatprep.subr.mxu0 0.0
    %692 = vmatpush1.msra.mxu0 %v608
    %693 = vmatprep.subr.mxu0 0.0
    %694 = vmatpush1.msra.mxu0 %v609
    %695 = vmatprep.mubr.f32.mxu0 %v574
    %696 = vmatmul.mubr.f32.gmra.mrb[0].mxu0 %v568
    %v697 = vpop.f32.mrb[0].mxu0
    %v698 = vadd.f32 %v623, %v697
    %v699 = vpop.f32.mrb[0].mxu0
    %700 = vmatprep.mubr.f32.mxu0 %v575
    %701 = vmatmul.mubr.f32.gmra.mrb[0].mxu0 %v569
    %v702 = vpop.f32.mrb[0].mxu0
    %v703 = vadd.f32 %v623, %v702
    %v704 = vpop.f32.mrb[0].mxu0
    %705 = vdwg.mxu0
    %706 = vmatprep.subr.mxu0 0.0
    %707 = vmatpush1.msra.mxu0 %v610
    %708 = vmatprep.subr.mxu0 0.0
    %709 = vmatpush1.msra.mxu0 %v611
    %710 = vmatprep.subr.mxu0 0.0
    %711 = vmatpush1.msra.mxu0 %v612
    %712 = vmatprep.subr.mxu0 0.0
    %713 = vmatpush1.msra.mxu0 %v613
    %714 = vmatprep.subr.mxu0 0.0
    %715 = vmatpush1.msra.mxu0 %v614
    %716 = vmatprep.subr.mxu0 0.0
    %717 = vmatpush1.msra.mxu0 %v615
    %718 = vmatprep.subr.mxu0 0.0
    %719 = vmatpush1.msra.mxu0 %v616
    %720 = vmatprep.subr.mxu0 0.0
    %721 = vmatpush1.msra.mxu0 %v617
    %722 = vmatprep.subr.mxu0 0.0
    %723 = vmatpush1.msra.mxu0 0.0
    %724 = vmatprep.subr.mxu0 0.0
    %725 = vmatpush1.msra.mxu0 0.0
    %726 = vmatprep.subr.mxu0 0.0
    %727 = vmatpush1.msra.mxu0 0.0
    %728 = vmatprep.subr.mxu0 0.0
    %729 = vmatpush1.msra.mxu0 0.0
    %730 = vmatprep.subr.mxu0 0.0
    %731 = vmatpush1.msra.mxu0 0.0
    %732 = vmatprep.subr.mxu0 0.0
    %733 = vmatpush1.msra.mxu0 0.0
    %734 = vmatprep.subr.mxu0 0.0
    %735 = vmatpush1.msra.mxu0 0.0
    %736 = vmatprep.subr.mxu0 0.0
    %737 = vmatpush1.msra.mxu0 0.0
    %738 = vmatprep.subr.mxu0 0.0
    %739 = vmatpush1.msra.mxu0 0.0
    %740 = vmatprep.subr.mxu0 0.0
    %741 = vmatpush1.msra.mxu0 0.0
    %742 = vmatprep.subr.mxu0 0.0
    %743 = vmatpush1.msra.mxu0 0.0
    %744 = vmatprep.subr.mxu0 0.0
    %745 = vmatpush1.msra.mxu0 0.0
    %746 = vmatprep.subr.mxu0 0.0
    %747 = vmatpush1.msra.mxu0 0.0
    %748 = vmatprep.subr.mxu0 0.0
    %749 = vmatpush1.msra.mxu0 0.0
    %750 = vmatprep.subr.mxu0 0.0
    %751 = vmatpush1.msra.mxu0 0.0
    %752 = vmatprep.subr.mxu0 0.0
    %753 = vmatpush1.msra.mxu0 0.0
    %754 = vmatprep.subr.mxu0 0.0
    %755 = vmatpush1.msra.mxu0 0.0
    %756 = vmatprep.subr.mxu0 0.0
    %757 = vmatpush1.msra.mxu0 0.0
    %758 = vmatprep.subr.mxu0 0.0
    %759 = vmatpush1.msra.mxu0 0.0
    %760 = vmatprep.subr.mxu0 0.0
    %761 = vmatpush1.msra.mxu0 0.0
    %762 = vmatprep.subr.mxu0 0.0
    %763 = vmatpush1.msra.mxu0 0.0
    %764 = vmatprep.subr.mxu0 0.0
    %765 = vmatpush1.msra.mxu0 0.0
    %766 = vmatprep.subr.mxu0 0.0
    %767 = vmatpush1.msra.mxu0 0.0
    %768 = vmatprep.subr.mxu0 0.0
    %769 = vmatpush1.msra.mxu0 0.0
    %770 = vmatprep.mubr.f32.mxu0 0.0
    %771 = vmatmul.mubr.f32.gmra.mrb[0].mxu0 %v626
    %v772 = vpop.f32.mrb[0].mxu0
    %v773 = vadd.f32 %v698, %v772
    %v774 = vpop.f32.mrb[0].mxu0
    %775 = vmatprep.mubr.f32.mxu0 0.0
    %776 = vmatmul.mubr.f32.gmra.mrb[0].mxu0 %v629
    %v777 = vpop.f32.mrb[0].mxu0
    %v778 = vadd.f32 %v703, %v777
    %v779 = vpop.f32.mrb[0].mxu0
    %780 = vdwg.mxu0
    %781 = vst [vmem:[#allocation7] sm:$0xff] %v773
    %782 = vst [vmem:[#allocation7 + $0x8] sm:$0xff] %v778
    // Predicated region
    $region22: #{tpu_custom_call.1} parent=1 // pred_check
      _
    $region23: #{tpu_custom_call.1} parent=1 // pred_check_branch
      %784 = sbr.rel (0) target = $region25
    $region24: #{tpu_custom_call.1} parent=1 // pred_region
      %s786 = ssub.s32 256, 256
      %787 = vsyncadd [#allocation4], %s786
      %s788 = sshll.u32 [#allocation7], 4
      %s789 = int_to_ptr.vmem [resolvable:$true] %s788
      %794 = dma.vmem_to_hbm [thread:$0]  %s789, 256, %s3, [#allocation4], 128, 128, 8
    $region25: #{tpu_custom_call.1} parent=1 // pred_fallthru
      _
    // Predicated region
    $region26: #{tpu_custom_call.1} parent=1 // pred_check
      _
    $region27: #{tpu_custom_call.1} parent=1 // pred_check_branch
      %796 = sbr.rel (0) target = $region29
    $region28: #{tpu_custom_call.1} parent=1 // pred_region
      %797 = dma.done [#allocation4], 256
    $region29: #{tpu_custom_call.1} parent=1 // pred_fallthru
      _
    %798 = vsyncpa [#allocation3], 1
    %799 = vsyncpa [#allocation6], 1
    %800 = vsyncpa [#allocation4], 1

</llo_original>
